<compile_context>
chip_gen: v5e
topology: v5e:2x2
jax: 0.10.0
libtpu: 0.0.40
codegen_flags: <defaults>
</compile_context>

<pallas_src>
import functools

import jax
import jax.numpy as jnp
from jax import lax
from jax.experimental import pallas as pl
from jax.experimental.pallas import tpu as pltpu

EPS = 1e-8


def _dist_matrix_kernel(bias_ref, a_ref, b_ref, o_ref, *,
                        m_total, kt, num_k, mask_k):
    # bias_ref: (1,) f32 scalar-prefetch ref (SMEM)
    # a_ref:    (1, TP, KT) tile of a (native dtype -> MXU)
    # b_ref:    (1, TR, KT) tile of b
    # o_ref:    (1, TP, TR) output tile; doubles as the accumulator over k
    a = a_ref[0]                                    # (TP, KT)
    b = b_ref[0]                                    # (TR, KT)

    if mask_k:
        # Edge K block: zero columns past M so garbage OOB reads cannot leak
        # into the feature-dim reduction.  (P/R edge garbage only lands in
        # rows/cols that Pallas masks on store, so it needs no handling.)
        k_start = pl.program_id(3) * kt
        lane = lax.broadcasted_iota(jnp.int32, (1, kt), 1)
        valid = (k_start + lane) < m_total
        zero = jnp.zeros((), a.dtype)
        a = jnp.where(valid, a, zero)
        b = jnp.where(valid, b, zero)

    # -2ab via an NT matmul on the MXU: contract both feature dims, no b.T.
    ab = lax.dot_general(
        a, b,
        dimension_numbers=(((1,), (1,)), ((), ())),
        preferred_element_type=jnp.float32,
    )                                               # (TP, TR) f32

    # Row norms recomputed in-kernel (XLU reduce) -- no wrapper HBM pass and
    # no (…,1) side-input DMA streams.
    a32 = a.astype(jnp.float32)
    b32 = b.astype(jnp.float32)
    asq = jnp.sum(a32 * a32, axis=-1, keepdims=True)        # (TP, 1)
    bsq = jnp.sum(b32 * b32, axis=-1).reshape(1, -1)        # (1, TR)

    sq_part = asq + bsq - 2.0 * ab                           # (TP, TR) f32

    num = bias_ref[0] + EPS                                  # bias + eps

    def epilogue(sq):
        dist = jnp.sqrt(jnp.maximum(sq, 0.0))                # cdist, p=2
        den = dist + num
        # approx reciprocal (EUP) + one Newton step (VPU) relieves the single
        # EUP slot that sqrt already saturates in the small-M regime.
        r = pl.reciprocal(den, approx=True)
        r = r * (2.0 - den * r)
        return (num * r).astype(o_ref.dtype)

    if num_k == 1:
        o_ref[0] = epilogue(sq_part)
    else:
        ki = pl.program_id(3)

        @pl.when(ki == 0)
        def _():
            o_ref[0] = sq_part.astype(o_ref.dtype)

        @pl.when(ki > 0)
        def _():
            o_ref[0] = (o_ref[0].astype(jnp.float32) + sq_part).astype(o_ref.dtype)

        @pl.when(ki == num_k - 1)
        def _():
            o_ref[0] = epilogue(o_ref[0].astype(jnp.float32))


def dist_matrix(a, b, bias, *, tp_max=512, tr_max=512, kt_max=1024,
                out_dtype=jnp.float32):
    """a: (B, P, M), b: (B, R, M), bias: scalar param. Returns (B, P, R)."""
    B, P, M = a.shape
    Bb, R, Mb = b.shape
    assert B == Bb and M == Mb

    # Tile selection: a block dim is legal if it is (8,128)-aligned or equals
    # the full array dim, so small dims become one full-extent tile (no
    # wrapper padding, no output slice afterwards).
    TP = tp_max if P > tp_max else P          # tp_max is a multiple of 8
    TR = tr_max if R > tr_max else R          # tr_max is a multiple of 128
    KT = kt_max if M > kt_max else M          # kt_max is a multiple of 128

    num_k = pl.cdiv(M, KT)
    mask_k = (M % KT) != 0
    assert num_k == 1 or out_dtype == jnp.float32, (
        "non-f32 output only supported when the feature dim fits one K tile")

    # k innermost: the output block stays resident (accumulator) across k,
    # and in the common num_k==1 case the a-tile is reused across r.
    grid = (B, pl.cdiv(P, TP), pl.cdiv(R, TR), num_k)

    # VMEM budget derived from the actual double-buffered tiles, clamped so
    # it is safe on v7x (64 MiB/TC) as well as v5e/v6e (128 MiB).
    in_bytes = a.dtype.itemsize
    out_bytes = jnp.dtype(out_dtype).itemsize
    est = 2 * (TP * KT * in_bytes + TR * KT * in_bytes + TP * TR * out_bytes)
    vmem_limit = int(min(max(est + (16 << 20), 24 << 20), 48 << 20))

    bias_arr = jnp.asarray(bias, jnp.float32).reshape((1,))

    kernel = functools.partial(
        _dist_matrix_kernel, m_total=M, kt=KT, num_k=num_k, mask_k=mask_k)

    grid_spec = pltpu.PrefetchScalarGridSpec(
        num_scalar_prefetch=1,
        grid=grid,
        in_specs=[
            pl.BlockSpec((1, TP, KT), lambda bi, pi, ri, ki, bias: (bi, pi, ki)),
            pl.BlockSpec((1, TR, KT), lambda bi, pi, ri, ki, bias: (bi, ri, ki)),
        ],
        out_specs=pl.BlockSpec((1, TP, TR), lambda bi, pi, ri, ki, bias: (bi, pi, ri)),
    )

    return pl.pallas_call(
        kernel,
        out_shape=jax.ShapeDtypeStruct((B, P, R), out_dtype),
        grid_spec=grid_spec,
        compiler_params=pltpu.CompilerParams(
            # Every (b, p, r) triple owns a distinct output block -> all three
            # are 'parallel' (lets v7x shard r across its 2 TensorCores even
            # when B and P/TP are small); only k is a reduction.
            dimension_semantics=("parallel", "parallel", "parallel", "arbitrary"),
            vmem_limit_bytes=vmem_limit,
        ),
    )(bias_arr, a, b)


if __name__ == "__main__":
    key = jax.random.PRNGKey(0)
    k1, k2 = jax.random.split(key)

    B, P, R, M = 2, 16, 24, 32
    a = jax.random.normal(k1, (B, P, M), dtype=jnp.float32)
    b = jax.random.normal(k2, (B, R, M), dtype=jnp.float32)

    # Parameter init (module __init__): bias = 1.0
    bias = 1.0

    out = dist_matrix(a, b, bias)
    out = jax.block_until_ready(out)

    # Pure-JAX reference (pairwise-difference cdist) for a sanity check.
    diff = a[:, :, None, :] - b[:, None, :, :]
    ref_dist = jnp.sqrt(jnp.sum(diff * diff, axis=-1))
    ref = (bias + EPS) / (ref_dist + bias + EPS)
    assert out.shape == ref.shape
    assert jnp.allclose(out, ref, atol=1e-5, rtol=1e-5), "mismatch vs reference"

    print("KERNEL_OK")
</pallas_src>

<mosaic_0001>
module attributes {stable_mosaic.version = 11 : i64} {
  func.func @_dist_matrix_kernel(%arg0: i32, %arg1: i32, %arg2: i32, %arg3: i32, %arg4: memref<1xf32, #tpu.memory_space<smem>>, %arg5: memref<1x16x32xf32, #tpu.memory_space<vmem>>, %arg6: memref<1x24x32xf32, #tpu.memory_space<vmem>>, %arg7: memref<1x16x24xf32, #tpu.memory_space<vmem>>) attributes {dimension_semantics = [#tpu.dimension_semantics<parallel>, #tpu.dimension_semantics<parallel>, #tpu.dimension_semantics<parallel>, #tpu.dimension_semantics<arbitrary>], iteration_bounds = array<i64: 2, 1, 1, 1>, scalar_prefetch = 1 : i64, scratch_operands = 0 : i64, tpu.core_type = #tpu.core_type<tc>, window_params = [{transform_indices = @transform_0, window_bounds = array<i64: 1, 16, 32>}, {transform_indices = @transform_1, window_bounds = array<i64: 1, 24, 32>}, {transform_indices = @transform_2, window_bounds = array<i64: 1, 16, 24>}]} {
    %c0 = arith.constant 0 : index
    %c0_0 = arith.constant 0 : index
    %c0_1 = arith.constant 0 : index
    %0 = vector.load %arg5[%c0, %c0_0, %c0_1] : memref<1x16x32xf32, #tpu.memory_space<vmem>>, vector<1x16x32xf32>
    %1 = vector.shape_cast %0 : vector<1x16x32xf32> to vector<16x32xf32>
    %c0_2 = arith.constant 0 : index
    %c0_3 = arith.constant 0 : index
    %c0_4 = arith.constant 0 : index
    %2 = vector.load %arg6[%c0_2, %c0_3, %c0_4] : memref<1x24x32xf32, #tpu.memory_space<vmem>>, vector<1x24x32xf32>
    %3 = vector.shape_cast %2 : vector<1x24x32xf32> to vector<24x32xf32>
    %cst = arith.constant dense<0.000000e+00> : vector<16x24xf32>
    %4 = tpu.matmul %1, %3, %cst {dimension_numbers = #tpu.dot_dimension_numbers<[1], [1], [0], [0], [0, 0, 1, 0], [], []>} : vector<16x32xf32>, vector<24x32xf32>, vector<16x24xf32> -> vector<16x24xf32>
    %5 = arith.mulf %1, %1 : vector<16x32xf32>
    %cst_5 = arith.constant dense<0.000000e+00> : vector<16xf32>
    %6 = vector.multi_reduction <add>, %5, %cst_5 [1] : vector<16x32xf32> to vector<16xf32>
    %7 = vector.shape_cast %6 : vector<16xf32> to vector<16x1xf32>
    %8 = arith.mulf %3, %3 : vector<24x32xf32>
    %cst_6 = arith.constant dense<0.000000e+00> : vector<24xf32>
    %9 = vector.multi_reduction <add>, %8, %cst_6 [1] : vector<24x32xf32> to vector<24xf32>
    %10 = vector.shape_cast %9 : vector<24xf32> to vector<1x24xf32>
    %11 = vector.broadcast %7 : vector<16x1xf32> to vector<16x24xf32>
    %12 = vector.broadcast %10 : vector<1x24xf32> to vector<16x24xf32>
    %13 = arith.addf %11, %12 : vector<16x24xf32>
    %cst_7 = arith.constant 2.000000e+00 : f32
    %14 = vector.broadcast %cst_7 : f32 to vector<16x24xf32>
    %15 = arith.mulf %14, %4 : vector<16x24xf32>
    %16 = arith.subf %13, %15 : vector<16x24xf32>
    %c0_8 = arith.constant 0 : index
    %17 = memref.load %arg4[%c0_8] : memref<1xf32, #tpu.memory_space<smem>>
    %cst_9 = arith.constant 9.99999993E-9 : f32
    %18 = arith.addf %17, %cst_9 : f32
    %cst_10 = arith.constant 0.000000e+00 : f32
    %19 = vector.broadcast %cst_10 : f32 to vector<16x24xf32>
    %20 = arith.maximumf %16, %19 : vector<16x24xf32>
    %21 = math.sqrt %20 : vector<16x24xf32>
    %22 = vector.broadcast %18 : f32 to vector<16x24xf32>
    %23 = arith.addf %21, %22 : vector<16x24xf32>
    %24 = tpu.reciprocal %23 {approx = true} : vector<16x24xf32> -> vector<16x24xf32>
    %25 = arith.mulf %23, %24 : vector<16x24xf32>
    %cst_11 = arith.constant 2.000000e+00 : f32
    %26 = vector.broadcast %cst_11 : f32 to vector<16x24xf32>
    %27 = arith.subf %26, %25 : vector<16x24xf32>
    %28 = arith.mulf %24, %27 : vector<16x24xf32>
    %29 = vector.broadcast %18 : f32 to vector<16x24xf32>
    %30 = arith.mulf %29, %28 : vector<16x24xf32>
    %c0_12 = arith.constant 0 : index
    %c0_13 = arith.constant 0 : index
    %c0_14 = arith.constant 0 : index
    %31 = vector.load %arg7[%c0_12, %c0_13, %c0_14] : memref<1x16x24xf32, #tpu.memory_space<vmem>>, vector<1x16x24xf32>
    %32 = vector.shape_cast %31 : vector<1x16x24xf32> to vector<16x24xf32>
    %33 = vector.shape_cast %30 : vector<16x24xf32> to vector<1x16x24xf32>
    tpu.vector_store %arg7[%c0_12, %c0_13, %c0_14], %33 {strides = array<i32>} : memref<1x16x24xf32, #tpu.memory_space<vmem>>, vector<1x16x24xf32>,
    return
  }
  func.func @transform_0(%arg0: i32, %arg1: i32, %arg2: i32, %arg3: i32, %arg4: memref<1xf32, #tpu.memory_space<smem>>) -> (i32, i32, i32) {
    %c0_i32 = arith.constant 0 : i32
    return %arg0, %arg1, %arg3 : i32, i32, i32
  }
  func.func @transform_1(%arg0: i32, %arg1: i32, %arg2: i32, %arg3: i32, %arg4: memref<1xf32, #tpu.memory_space<smem>>) -> (i32, i32, i32) {
    %c0_i32 = arith.constant 0 : i32
    return %arg0, %arg2, %arg3 : i32, i32, i32
  }
  func.func @transform_2(%arg0: i32, %arg1: i32, %arg2: i32, %arg3: i32, %arg4: memref<1xf32, #tpu.memory_space<smem>>) -> (i32, i32, i32) {
    %c0_i32 = arith.constant 0 : i32
    return %arg0, %arg1, %arg2 : i32, i32, i32
  }
}

</mosaic_0001>

<llo_original>
// kernel: tpu_custom_call.1
$region0: #{tpu_custom_call.1}
  #allocation0 [shape = 'u32[]', space=smem, size = 0x4, offset = 0x4, fixed_abs, tag = 'smem constant byte address 0x4 - core index']
  #allocation1 [shape = 'u32[72,128]{1,0:T(1,128)}', space=vmem, size = 0x9000, scoped, tag = 'internal scratch']
  #allocation2 [shape = 's32[1]{0}', space=sflag, size = 0x4, scoped, tag = 'scoped memory for tpu_custom_call.1']
  #allocation3 [shape = 'f32[1]{0:T(128)S(6)}', space=smem, size = 0x200, scoped, tag = 'prefetched SMEM operand 0']
  %s0 = inlined_call_operand.<no memory space> [shape: f32[1], index: 0, kind: input, shape index: {}]
  %s1 = inlined_call_operand.hbm [shape: f32[2,16,32], index: 1, kind: input, shape index: {}]
  %s2 = inlined_call_operand.hbm [shape: f32[2,24,32], index: 2, kind: input, shape index: {}]
  %s3 = inlined_call_operand.hbm [shape: f32[2,16,24], index: 3, kind: output, shape index: {}]
  %s4 = sld [smem:[#allocation0]]
  $region49: #{tpu_custom_call.1} parent=0
    _
  %s6 = ssub.s32 1, %s4
  %s7 = scalar_select 0, %s6, %s4
  %8 = sst [smem:[#allocation3]] %s0
  $region1: #{tpu_custom_call.1} parent=0
    #allocation4 [shape = 'u8[16384]{0}', space=vmem, size = 0x4000, scoped, tag = 'input window, operand 1']
    #allocation5 [shape = 's32[2]{0}', space=sflag, size = 0x8, scoped, tag = 'scoped memory for tpu_custom_call.1']
    #allocation6 [shape = 's32[2]{0}', space=sflag, size = 0x8, scoped, tag = 'scoped memory for tpu_custom_call.1']
    #allocation7 [shape = 'u8[24576]{0}', space=vmem, size = 0x6000, scoped, tag = 'input window, operand 2']
    #allocation8 [shape = 's32[2]{0}', space=sflag, size = 0x8, scoped, tag = 'scoped memory for tpu_custom_call.1']
    #allocation9 [shape = 'u8[16384]{0}', space=vmem, size = 0x4000, scoped, tag = 'output window, operand 0']
    %9 = vsyncpa [#allocation5], 0
    %s10 = scalar_lea.sflag [#allocation5], 1
    %11 = vsyncpa %s10, 0
    %12 = vsyncpa [#allocation8], 0
    %s13 = scalar_lea.sflag [#allocation8], 1
    %14 = vsyncpa %s13, 0
    %15 = vsyncpa [#allocation6], 0
    %s16 = scalar_lea.sflag [#allocation6], 1
    %17 = vsyncpa %s16, 0
    loop: start=0, step=1, limit=4
    $region2: #{tpu_custom_call.1} parent=1 // loop_pre_header
      _
    $region3: #{tpu_custom_call.1} parent=1 // loop_header
      %s19 = sphi 0, %s23
      %p20 = scmp.ge.s32.totalorder %s19, 4
      %s26 = sphi 0, %s52
      %s27 = sphi 0, %s48
      %s28 = sphi 0, %s44
      %s29 = sphi 0, %s40
      %s30 = sphi 0, %s26
      %s31 = sphi 0, %s27
      %s32 = sphi 0, %s28
      %s33 = sphi 0, %s29
      %s34 = sphi 0, %s30
      %s35 = sphi 0, %s31
      %s36 = sphi 0, %s32
      %s37 = sphi 0, %s33
      %s59 = sphi 0, %s61
      %s62 = sphi 0, %s59
      %s63 = sphi 0, %s62
      %s79 = sphi 0, %s63
      %s89 = sphi 0, %s91
      %s92 = sphi 0, %s89
      %s93 = sphi 0, %s92
      %s109 = sphi 0, %s93
      %s119 = sphi 0, %s121
      %s122 = sphi 0, %s119
      %s123 = sphi 0, %s122
      %s139 = sphi 0, %s123
    $region4: #{tpu_custom_call.1} parent=1 // loop_header_branch
      %22 = sbr.rel (%p20) target = $region8
    $region5: #{tpu_custom_call.1} parent=1 // loop_body
      %s24 = ssub.s32 %s19, 1
      %s25 = ssub.s32 %s19, 2
      %s38 = sadd.s32 1, %s29
      %p39 = scmp.ge.s32.totalorder %s38, 1
      %s40 = scalar_select %p39, 0, %s38
      %s41 = sadd.s32 1, %s28
      %s42 = scalar_select %p39, %s41, %s28
      %p43 = scmp.ge.s32.totalorder %s42, 1
      %s44 = scalar_select %p43, 0, %s42
      %s45 = sadd.s32 1, %s27
      %s46 = scalar_select %p43, %s45, %s27
      %p47 = scmp.ge.s32.totalorder %s46, 1
      %s48 = scalar_select %p47, 0, %s46
      %s49 = sadd.s32 1, %s26
      %s50 = scalar_select %p47, %s49, %s26
      %p51 = scmp.ge.s32.totalorder %s50, 2
      %s52 = scalar_select %p51, 0, %s50
      %s53 = ssub.s32 %s26, %s52
      %s54 = ssub.s32 %s27, %s48
      %s55 = sor.u32 %s53, %s54
      %s56 = ssub.s32 %s29, %s40
      %s57 = sor.u32 %s55, %s56
      %p58 = scmp.eq.s32.totalorder %s57, 0
      %s60 = sadd.s32 %s59, 1
      %s61 = scalar_select %p58, %s59, %s60
      %p64 = pneg %p58
      %p65 = scmp.eq.s32.totalorder %s19, 1
      %p66 = por %p64, %p65
      %p67 = scmp.ne.s32.totalorder %s59, %s62
      %p68 = scmp.eq.s32.totalorder %s19, 0
      %p69 = por %p67, %p68
      %p70 = scmp.ne.s32.totalorder %s59, %s62
      %p71 = scmp.eq.s32.totalorder %s24, 1
      %p72 = por %p70, %p71
      %p73 = scmp.ne.s32.totalorder %s62, %s63
      %p74 = scmp.eq.s32.totalorder %s24, 0
      %p75 = por %p73, %p74
      %p76 = scmp.ne.s32.totalorder %s62, %s63
      %p77 = scmp.eq.s32.totalorder %s25, 1
      %p78 = por %p76, %p77
      %p80 = scmp.ne.s32.totalorder %s63, %s79
      %p81 = scmp.eq.s32.totalorder %s25, 0
      %p82 = por %p80, %p81
      %s83 = ssub.s32 %s26, %s52
      %s84 = ssub.s32 %s28, %s44
      %s85 = sor.u32 %s83, %s84
      %s86 = ssub.s32 %s29, %s40
      %s87 = sor.u32 %s85, %s86
      %p88 = scmp.eq.s32.totalorder %s87, 0
      %s90 = sadd.s32 %s89, 1
      %s91 = scalar_select %p88, %s89, %s90
      %p94 = pneg %p88
      %p95 = scmp.eq.s32.totalorder %s19, 1
      %p96 = por %p94, %p95
      %p97 = scmp.ne.s32.totalorder %s89, %s92
      %p98 = scmp.eq.s32.totalorder %s19, 0
      %p99 = por %p97, %p98
      %p100 = scmp.ne.s32.totalorder %s89, %s92
      %p101 = scmp.eq.s32.totalorder %s24, 1
      %p102 = por %p100, %p101
      %p103 = scmp.ne.s32.totalorder %s92, %s93
      %p104 = scmp.eq.s32.totalorder %s24, 0
      %p105 = por %p103, %p104
      %p106 = scmp.ne.s32.totalorder %s92, %s93
      %p107 = scmp.eq.s32.totalorder %s25, 1
      %p108 = por %p106, %p107
      %p110 = scmp.ne.s32.totalorder %s93, %s109
      %p111 = scmp.eq.s32.totalorder %s25, 0
      %p112 = por %p110, %p111
      %s113 = ssub.s32 %s26, %s52
      %s114 = ssub.s32 %s27, %s48
      %s115 = sor.u32 %s113, %s114
      %s116 = ssub.s32 %s28, %s44
      %s117 = sor.u32 %s115, %s116
      %p118 = scmp.eq.s32.totalorder %s117, 0
      %s120 = sadd.s32 %s119, 1
      %s121 = scalar_select %p118, %s119, %s120
      %p124 = pneg %p118
      %p125 = scmp.eq.s32.totalorder %s19, 1
      %p126 = por %p124, %p125
      %p127 = scmp.ne.s32.totalorder %s119, %s122
      %p128 = scmp.eq.s32.totalorder %s19, 0
      %p129 = por %p127, %p128
      %p130 = scmp.ne.s32.totalorder %s119, %s122
      %p131 = scmp.eq.s32.totalorder %s24, 1
      %p132 = por %p130, %p131
      %p133 = scmp.ne.s32.totalorder %s122, %s123
      %p134 = scmp.eq.s32.totalorder %s24, 0
      %p135 = por %p133, %p134
      %p136 = scmp.ne.s32.totalorder %s122, %s123
      %p137 = scmp.eq.s32.totalorder %s25, 1
      %p138 = por %p136, %p137
      %p140 = scmp.ne.s32.totalorder %s123, %s139
      %p141 = scmp.eq.s32.totalorder %s25, 0
      %p142 = por %p140, %p141
      %p143 = scmp.le.s32.totalorder 1, %s19
      %p144 = scmp.lt.s32.totalorder %s19, 3
      %p145 = pnand %p143, %p144
      %p146 = pneg %p145
      // Predicated region
      $region9: #{tpu_custom_call.1} parent=5 // pred_check
        _
      $region10: #{tpu_custom_call.1} parent=5 // pred_check_branch
        %148 = sbr.rel (%p145) target = $region12
      $region11: #{tpu_custom_call.1} parent=5 // pred_region
        %s149 = ssub.s32 %s19, 1
      $region12: #{tpu_custom_call.1} parent=5 // pred_fallthru
        _
      %p150 = scmp.lt.s32.totalorder %s19, 2
      // Predicated region
      $region13: #{tpu_custom_call.1} parent=5 // pred_check
        %p151 = pneg %p150
      $region14: #{tpu_custom_call.1} parent=5 // pred_check_branch
        %153 = sbr.rel (%p151) target = $region16
      $region15: #{tpu_custom_call.1} parent=5 // pred_region
        // Predicated region
        $region17: #{tpu_custom_call.1} parent=15 // pred_check
          %p154 = pneg %p69
        $region18: #{tpu_custom_call.1} parent=15 // pred_check_branch
          %156 = sbr.rel (%p154) target = $region20
        $region19: #{tpu_custom_call.1} parent=15 // pred_region
          %s157 = sand.u32 %s59, 1
          %s158 = scalar_lea.sflag [#allocation5], %s157
          %s159 = sand.u32 %s59, 1
          %s160 = smul.addr %s159, 16
          %s161 = scalar_lea.vmem [#allocation4], %s160
          %s162 = smul.u32 2, %s27
          %164 = vsyncadd %s158, 0
          %s165 = sadd.s32 %s29, %s162
          %s166 = smul.addr %s26, 2
          %s167 = sadd.s32 %s165, %s166
          %s168 = smul.addr %s167, 8
          %s169 = scalar_lea.hbm %s1, %s168
          %s170 = sshll.u32 %s169, 4
          %s171 = int_to_ptr.hbm [resolvable:$true] %s170
          %s172 = sshll.u32 %s161, 4
          %s173 = int_to_ptr.vmem [resolvable:$true] %s172
          %178 = dma.hbm_to_vmem [thread:$0]  %s171, 256, %s173, %s158, 128, 128, 8
        $region20: #{tpu_custom_call.1} parent=15 // pred_fallthru
          _
        // Predicated region
        $region21: #{tpu_custom_call.1} parent=15 // pred_check
          %p179 = pneg %p99
        $region22: #{tpu_custom_call.1} parent=15 // pred_check_branch
          %181 = sbr.rel (%p179) target = $region24
        $region23: #{tpu_custom_call.1} parent=15 // pred_region
          %s182 = sand.u32 %s89, 1
          %s183 = scalar_lea.sflag [#allocation8], %s182
          %s184 = sand.u32 %s89, 1
          %s185 = smul.addr %s184, 24
          %s186 = scalar_lea.vmem [#allocation7], %s185
          %s187 = smul.u32 3, %s28
          %189 = vsyncadd %s183, 0
          %s190 = sadd.s32 %s29, %s187
          %s191 = smul.addr %s26, 3
          %s192 = sadd.s32 %s190, %s191
          %s193 = smul.addr %s192, 8
          %s194 = scalar_lea.hbm %s2, %s193
          %s195 = sshll.u32 %s194, 4
          %s196 = int_to_ptr.hbm [resolvable:$true] %s195
          %s197 = sshll.u32 %s186, 4
          %s198 = int_to_ptr.vmem [resolvable:$true] %s197
          %203 = dma.hbm_to_vmem [thread:$0]  %s196, 384, %s198, %s183, 128, 128, 8
        $region24: #{tpu_custom_call.1} parent=15 // pred_fallthru
          _
      $region16: #{tpu_custom_call.1} parent=5 // pred_fallthru
        _
      %p204 = scmp.le.s32.totalorder 1, %s19
      %p205 = scmp.lt.s32.totalorder %s19, 3
      %p206 = pnand %p204, %p205
      %p207 = pneg %p206
      // Predicated region
      $region25: #{tpu_custom_call.1} parent=5 // pred_check
        _
      $region26: #{tpu_custom_call.1} parent=5 // pred_check_branch
        %209 = sbr.rel (%p206) target = $region28
      $region27: #{tpu_custom_call.1} parent=5 // pred_region
        %s210 = ssub.s32 %s19, 1
        %s211 = sand.u32 %s62, 1
        %s212 = scalar_lea.sflag [#allocation5], %s211
        %s213 = sand.u32 %s62, 1
        %s214 = smul.addr %s213, 16
        %s215 = scalar_lea.vmem [#allocation4], %s214
        // Predicated region
        $region29: #{tpu_custom_call.1} parent=27 // pred_check
          %p216 = pneg %p75
        $region30: #{tpu_custom_call.1} parent=27 // pred_check_branch
          %218 = sbr.rel (%p216) target = $region32
        $region31: #{tpu_custom_call.1} parent=27 // pred_region
          %220 = dma.done %s212, 256
        $region32: #{tpu_custom_call.1} parent=27 // pred_fallthru
          _
        %s221 = sand.u32 %s92, 1
        %s222 = scalar_lea.sflag [#allocation8], %s221
        %s223 = sand.u32 %s92, 1
        %s224 = smul.addr %s223, 24
        %s225 = scalar_lea.vmem [#allocation7], %s224
        // Predicated region
        $region33: #{tpu_custom_call.1} parent=27 // pred_check
          %p226 = pneg %p105
        $region34: #{tpu_custom_call.1} parent=27 // pred_check_branch
          %228 = sbr.rel (%p226) target = $region36
        $region35: #{tpu_custom_call.1} parent=27 // pred_region
          %230 = dma.done %s222, 384
        $region36: #{tpu_custom_call.1} parent=27 // pred_fallthru
          _
        %s231 = sand.u32 %s62, 1
        %s232 = scalar_lea.sflag [#allocation5], %s231
        %s233 = sand.u32 %s62, 1
        %s234 = smul.addr %s233, 16
        %s235 = scalar_lea.vmem [#allocation4], %s234
        %p236 = pneg %p75
        %p237 = pneg %p72
        %s238 = sand.u32 %s92, 1
        %s239 = scalar_lea.sflag [#allocation8], %s238
        %s240 = sand.u32 %s92, 1
        %s241 = smul.addr %s240, 24
        %s242 = scalar_lea.vmem [#allocation7], %s241
        %p243 = pneg %p105
        %p244 = pneg %p102
        %p245 = pneg %p135
        %p246 = pneg %p132
        %s247 = sand.u32 %s122, 1
        %s248 = scalar_lea.sflag [#allocation6], %s247
        %s249 = sand.u32 %s122, 1
        %s250 = smul.addr %s249, 16
        %s251 = scalar_lea.vmem [#allocation9], %s250
        %s252 = smul.u32 2, %s31
        %s253 = smul.u32 3, %s32
        %s254 = smul.u32 2, %s31
        %v255 = vld [vmem:[%s215] sm:$0xff]
        %v256 = vld [vmem:[%s215 + $0x8] sm:$0xff]
        %v257 = vld [vmem:[%s225] sm:$0xff]
        %v258 = vld [vmem:[%s225 + $0x8] sm:$0xff]
        %v259 = vld [vmem:[%s225 + $0x10] sm:$0xff]
        %vm260 = vcmask 261120
        %v262 = vsel %vm260, %v255, 0
        %v265 = vsel %vm260, %v256, 0
        %v268 = vsel %vm260, %v257, 0
        %v271 = vsel %vm260, %v258, 0
        %v274 = vsel %vm260, %v259, 0
        %276 = vmatpush.xpose.msra.mxu0 0.0
        %277 = vmatpush.xpose.msra.mxu0 0.0
        %278 = vmatpush.xpose.msra.mxu0 0.0
        %279 = vmatpush.xpose.msra.mxu0 0.0
        %280 = vmatpush.xpose.msra.mxu0 0.0
        %281 = vmatpush.xpose.msra.mxu0 0.0
        %282 = vmatpush.xpose.msra.mxu0 0.0
        %283 = vmatpush.xpose.msra.mxu0 0.0
        %284 = vmatpush.xpose.msra.mxu0 0.0
        %285 = vmatpush.xpose.msra.mxu0 0.0
        %286 = vmatpush.xpose.msra.mxu0 0.0
        %287 = vmatpush.xpose.msra.mxu0 0.0
        %288 = vmatpush.xpose.msra.mxu0 0.0
        %289 = vmatpush.xpose.msra.mxu0 %v274
        %290 = vmatpush.xpose.msra.mxu0 %v271
        %291 = vmatpush.xpose.msra.mxu0 %v268
        %292 = vmatmul.f32.gmra.mxu0 %v262
        %v293 = vpop.f32.mrf.mxu0
        %v294 = vadd.f32 0.0, %v293
        %295 = vmatmul.f32.gmra.mxu0 %v265
        %v296 = vpop.f32.mrf.mxu0
        %v297 = vadd.f32 0.0, %v296
        %298 = vdwg.mxu0
        %v299 = vmul.f32 %v255, %v255
        %v300 = vmul.f32 %v256, %v256
        %v301 = vsel %vm260, %v299, 0.0
        %302 = vadd.xlane.f32.xlu0 %v301
        %v303 = vpop.xlane.xlu0 %302
        %v304 = vsel %vm260, %v300, 0.0
        %305 = vadd.xlane.f32.xlu0 %v304
        %v306 = vpop.xlane.xlu0 %305
        %v307 = vmul.f32 %v257, %v257
        %v308 = vmul.f32 %v258, %v258
        %v309 = vmul.f32 %v259, %v259
        %v310 = vsel %vm260, %v307, 0.0
        %311 = vadd.xlane.f32.xlu0 %v310
        %v312 = vpop.xlane.xlu0 %311
        %v313 = vsel %vm260, %v308, 0.0
        %314 = vadd.xlane.f32.xlu0 %v313
        %v315 = vpop.xlane.xlu0 %314
        %v316 = vsel %vm260, %v309, 0.0
        %317 = vadd.xlane.f32.xlu0 %v316
        %v318 = vpop.xlane.xlu0 %317
        %v322 = vlaneseq
        %v323 = vand.u32 %v322, 127
        %v324 = vperm.slane %v312, %v323
        %v325 = vadd.s32 %v323, 4294967288
        %v326 = vperm.slane %v315, %v325
        %vm327 = vcmask 130112
        %v328 = vsel %vm327, %v326, %v324
        %v329 = vadd.s32 %v323, 4294967280
        %v330 = vperm.slane %v318, %v329
        %vm331 = vcmask 195712
        %v332 = vsel %vm331, %v330, %v328
        %vm333 = vcmask 1042434
        %v334 = vsel %vm333, %v332, %v332
        %vm335 = vcmask 1043459
        %v336 = vsel %vm335, %v332, %v334
        %vm337 = vcmask 1044484
        %v338 = vsel %vm337, %v332, %v336
        %vm339 = vcmask 1045509
        %v340 = vsel %vm339, %v332, %v338
        %vm341 = vcmask 1046534
        %v342 = vsel %vm341, %v332, %v340
        %vm343 = vcmask 1047559
        %v344 = vsel %vm343, %v332, %v342
        %v346 = vadd.f32 %v303, %v344
        %v347 = vadd.f32 %v306, %v344
        %v348 = vmul.f32 %v294, 2.0
        %v349 = vmul.f32 %v297, 2.0
        %v350 = vsub.f32 %v346, %v348
        %v351 = vsub.f32 %v347, %v349
        %s352 = sld [smem:[#allocation3]]
        %s353 = sadd.f32 %s352, 1e-08
        %v354 = vmax.f32 %v350, 0.0
        %v355 = vmax.f32 %v351, 0.0
        %v356 = vrsqrt.pop %v354
        %v357 = vmul.f32 %v356, %v354
        %v358 = vmul.f32 %v357, %v356
        %v359 = vmul.f32 0.5, %v358
        %v360 = vsub.f32 1.5, %v359
        %v361 = vmul.f32 %v356, %v360
        %v362 = vmul.f32 %v354, %v361
        %vm363 = vcmp.eq.f32.partialorder %v354, inf
        %v364 = vsel %vm363, %v354, %v362
        %vm365 = vcmp.eq.f32.partialorder %v354, 0.0
        %v366 = vand.u32 %v354, 2147483648
        %v367 = vsel %vm365, %v366, %v364
        %v368 = vrsqrt.pop %v355
        %v369 = vmul.f32 %v368, %v355
        %v370 = vmul.f32 %v369, %v368
        %v371 = vmul.f32 0.5, %v370
        %v372 = vsub.f32 1.5, %v371
        %v373 = vmul.f32 %v368, %v372
        %v374 = vmul.f32 %v355, %v373
        %vm375 = vcmp.eq.f32.partialorder %v355, inf
        %v376 = vsel %vm375, %v355, %v374
        %vm377 = vcmp.eq.f32.partialorder %v355, 0.0
        %v378 = vand.u32 %v355, 2147483648
        %v379 = vsel %vm377, %v378, %v376
        %v380 = vstv %s353
        %v381 = vadd.f32 %v367, %v380
        %v382 = vadd.f32 %v379, %v380
        %v383 = vrcp.pop %v381
        %v384 = vrcp.pop %v382
        %v385 = vmul.f32 %v381, %v383
        %v386 = vmul.f32 %v382, %v384
        %v387 = vsub.f32 2.0, %v385
        %v388 = vsub.f32 2.0, %v386
        %v389 = vmul.f32 %v383, %v387
        %v390 = vmul.f32 %v384, %v388
        %v391 = vmul.f32 %v380, %v389
        %v392 = vmul.f32 %v380, %v390
        %vm393 = vcmask 195584
        %394 = vst.msk [vmem:[%s251] sm:$0xff] %vm393, %v391
        %395 = vst.msk [vmem:[%s251 + $0x8] sm:$0xff] %vm393, %v392
        %s396 = sand.u32 %s122, 1
        %s397 = scalar_lea.sflag [#allocation6], %s396
        %s398 = sand.u32 %s122, 1
        %s399 = smul.addr %s398, 16
        %s400 = scalar_lea.vmem [#allocation9], %s399
        // Predicated region
        $region37: #{tpu_custom_call.1} parent=27 // pred_check
          %p401 = pneg %p132
        $region38: #{tpu_custom_call.1} parent=27 // pred_check_branch
          %403 = sbr.rel (%p401) target = $region40
        $region39: #{tpu_custom_call.1} parent=27 // pred_region
          %s404 = smul.u32 2, %s31
          %406 = vsyncadd %s397, 0
          %s407 = sadd.s32 %s32, %s404
          %s408 = smul.addr %s30, 2
          %s409 = sadd.s32 %s407, %s408
          %s410 = smul.addr %s409, 8
          %s411 = scalar_lea.hbm %s3, %s410
          %s412 = sshll.u32 %s400, 4
          %s413 = int_to_ptr.vmem [resolvable:$true] %s412
          %s414 = sshll.u32 %s411, 4
          %s415 = int_to_ptr.hbm [resolvable:$true] %s414
          %420 = dma.vmem_to_hbm [thread:$0]  %s413, 256, %s415, %s397, 128, 128, 8
        $region40: #{tpu_custom_call.1} parent=27 // pred_fallthru
          _
      $region28: #{tpu_custom_call.1} parent=5 // pred_fallthru
        _
      %p421 = scmp.le.s32.totalorder 2, %s19
      // Predicated region
      $region41: #{tpu_custom_call.1} parent=5 // pred_check
        %p422 = pneg %p421
      $region42: #{tpu_custom_call.1} parent=5 // pred_check_branch
        %424 = sbr.rel (%p422) target = $region44
      $region43: #{tpu_custom_call.1} parent=5 // pred_region
        %s425 = ssub.s32 %s19, 2
        // Predicated region
        $region45: #{tpu_custom_call.1} parent=43 // pred_check
          %p426 = pneg %p138
        $region46: #{tpu_custom_call.1} parent=43 // pred_check_branch
          %428 = sbr.rel (%p426) target = $region48
        $region47: #{tpu_custom_call.1} parent=43 // pred_region
          %s429 = sand.u32 %s123, 1
          %s430 = scalar_lea.sflag [#allocation6], %s429
          %s431 = sand.u32 %s123, 1
          %s432 = smul.addr %s431, 16
          %s433 = scalar_lea.vmem [#allocation9], %s432
          %435 = dma.done %s430, 256
        $region48: #{tpu_custom_call.1} parent=43 // pred_fallthru
          _
      $region44: #{tpu_custom_call.1} parent=5 // pred_fallthru
        _
    $region6: #{tpu_custom_call.1} parent=1 // loop_footer
      %s23 = sadd.s32 1, %s19
    $region7: #{tpu_custom_call.1} parent=1 // loop_footer_branch
      %18 = sbr.rel target = $region3
    $region8: #{tpu_custom_call.1} parent=1 // loop_exit
      _
    %436 = vsyncpa [#allocation5], 1
    %s437 = scalar_lea.sflag [#allocation5], 1
    %438 = vsyncpa %s437, 1
    %439 = vsyncpa [#allocation8], 1
    %s440 = scalar_lea.sflag [#allocation8], 1
    %441 = vsyncpa %s440, 1
    %442 = vsyncpa [#allocation6], 1
    %s443 = scalar_lea.sflag [#allocation6], 1
    %444 = vsyncpa %s443, 1

</llo_original>
